<compile_context>
chip_gen: v7x
topology: tpu7x:2x2x1
jax: 0.10.0
libtpu: 0.0.40
codegen_flags: <defaults>
</compile_context>

<pallas_src>
import functools
import math
import warnings

import jax
import jax.numpy as jnp
import numpy as np
from jax.experimental import pallas as pl
from jax.experimental.pallas import tpu as pltpu

_LANES = 128
_SUBLANES = 8
_P1_MAX_BLOCK_ROWS = 16384       # 8 MiB f32 per block (pass 1: single stream)
_P2_MAX_BLOCK_ROWS = 8192        # 4 MiB f32 per block (pass 2: in + out)
_ACC_ROWS = 64                   # width of pass-1 resident max accumulator
_VMEM_LIMIT = 40 * 1024 * 1024   # <= 40 MiB scoped VMEM (v7x has 64 MiB phys)
_LOG10_SCALE = 10.0 / math.log(10.0)   # 10*log10(x) == _LOG10_SCALE * ln(x)


def _num_reduction_chunks() -> int:
    """Parallel partial-max chunks in pass 1 (~ TensorCores per chip)."""
    # 2 covers v7x (2 TCs/chip); on single-TC v5e/v6e the extra chunk costs at
    # most one skipped filler step and one tiny accumulator block, so the
    # hardware query below is best-effort only.
    try:
        info = pltpu.get_tpu_info()
        for attr in ("num_cores", "tensorcores_per_chip", "core_count"):
            v = getattr(info, attr, None)
            if isinstance(v, (int, np.integer)) and v > 0:
                return int(max(1, min(int(v), 2)))
    except Exception:
        pass
    return 2


def _max_kernel(s_ref, pmax_ref, *, block_rows, acc_rows, total_rows,
                total_blocks, blocks_per_chunk):
    """Pass 1: per-chunk running elementwise max of S into (acc_rows, 128)."""
    chunk = pl.program_id(0)
    step = pl.program_id(1)
    blk = chunk * blocks_per_chunk + step
    tail_rows = total_rows % block_rows          # static Python int

    @pl.when(step == 0)
    def _():
        pmax_ref[...] = jnp.full(pmax_ref.shape, -jnp.inf, jnp.float32)

    def _fold_full():
        x = s_ref[...].astype(jnp.float32)
        # (block_rows // acc_rows) slabs reduced elementwise into the resident
        # accumulator: acc_rows/8 independent vmax chains instead of one long
        # serial chain.
        x = x.reshape(block_rows // acc_rows, acc_rows, _LANES).max(axis=0)
        pmax_ref[...] = jnp.maximum(pmax_ref[...], x)

    if tail_rows == 0:
        @pl.when(blk < total_blocks)             # skip OOB filler steps
        def _():
            _fold_full()
    else:
        @pl.when(blk < total_blocks - 1)
        def _():
            _fold_full()

        @pl.when(blk == total_blocks - 1)
        def _():
            # Partial tail block: statically slice off the rows past the end
            # of the slab (the rest of the VMEM buffer is stale data), so no
            # iota/where masking is needed anywhere in the hot loop.
            x = s_ref[pl.ds(0, tail_rows), :].astype(jnp.float32)
            x = x.reshape(tail_rows // _SUBLANES, _SUBLANES, _LANES).max(axis=0)
            pmax_ref[pl.ds(0, _SUBLANES), :] = jnp.maximum(
                pmax_ref[pl.ds(0, _SUBLANES), :], x)


def _db_floor_kernel(pmax_ref, s_ref, o_ref, *, amin, ref_db, top_db):
    """Pass 2 (top_db set): dB conversion + clamp against the global floor."""
    # Re-derive the clamp floor from the tiny VMEM-resident partial-max slab.
    # A few XLU vregs per multi-MiB block, and safe under the megacore
    # ("parallel",) grid split (no cross-core step-0 init needed).
    gmax = jnp.max(pmax_ref[...])
    floor = _LOG10_SCALE * jnp.log(jnp.maximum(gmax, amin)) - ref_db - top_db
    log_spec = (_LOG10_SCALE
                * jnp.log(jnp.maximum(s_ref[...].astype(jnp.float32), amin))
                - ref_db)
    o_ref[...] = jnp.maximum(log_spec, floor)


def _db_kernel(s_ref, o_ref, *, amin, ref_db):
    """Pass 2 (top_db is None): plain dB conversion."""
    o_ref[...] = (_LOG10_SCALE
                  * jnp.log(jnp.maximum(s_ref[...].astype(jnp.float32), amin))
                  - ref_db)


def power_to_db(S, ref=1.0, amin=1e-10, top_db=80.0):
    if amin <= 0:
        raise ValueError("amin must be strictly positive")
    if top_db is not None and top_db < 0:
        raise ValueError("top_db must be non-negative")
    if callable(ref):
        # TODO(synk): callable `ref` (data-dependent reference) not supported.
        raise NotImplementedError("callable ref is not supported")

    S = jnp.asarray(S)
    if jnp.iscomplexobj(S):
        warnings.warn("power_to_db called on complex input; discarding phase.")
        S = jnp.abs(S)
    # bf16 inputs are streamed natively (half the input HBM bytes) and upcast
    # in-register; everything else is computed in (and stored as) float32.
    if S.dtype != jnp.bfloat16:
        S = S.astype(jnp.float32)

    orig_shape = S.shape
    n = int(np.prod(orig_shape))
    if n == 0:
        return jnp.zeros(orig_shape, jnp.float32)

    amin = float(amin)
    # NOTE: array-valued `ref` must be a scalar (0-d); float() raises
    # otherwise, mirroring the scalar-ref contract of the torch module.
    ref_db = 10.0 * math.log10(max(abs(float(ref)), amin))

    # Lane-dense slab: flatten row-major, view as (R, 128).  Pad with 0.0
    # (0 <= amin, so padding can never raise max(S, amin), for any dtype) only
    # when n is not a multiple of the packed-row granule.
    itemsize = jnp.dtype(S.dtype).itemsize
    row_align = _SUBLANES * (4 // itemsize)      # 8 rows f32, 16 rows bf16
    flat = S.reshape(-1)
    pad = (-n) % (row_align * _LANES)
    if pad:
        flat = jnp.pad(flat, (0, pad))           # zero padding
    total_rows = flat.shape[0] // _LANES
    x2d = flat.reshape(total_rows, _LANES)

    extra_in = ()
    extra_specs = []
    if top_db is not None:
        # ---------------- pass 1: global max of S ----------------
        p1_rows = min(_P1_MAX_BLOCK_ROWS, total_rows)
        p1_blocks = pl.cdiv(total_rows, p1_rows)
        acc_rows = math.gcd(p1_rows, _ACC_ROWS)
        nchunks = min(_num_reduction_chunks(), p1_blocks)
        blocks_per_chunk = pl.cdiv(p1_blocks, nchunks)
        nchunks = pl.cdiv(p1_blocks, blocks_per_chunk)

        def _in_map(chunk, step):
            blk = chunk * blocks_per_chunk + step
            # Filler steps of the last chunk re-map to the last real block;
            # the block index repeats, so no re-DMA happens, and the kernel
            # body skips their compute via pl.when.
            return (jnp.minimum(blk, p1_blocks - 1), 0)

        k1 = functools.partial(
            _max_kernel, block_rows=p1_rows, acc_rows=acc_rows,
            total_rows=total_rows, total_blocks=p1_blocks,
            blocks_per_chunk=blocks_per_chunk)

        partial_max = pl.pallas_call(
            k1,
            out_shape=jax.ShapeDtypeStruct((nchunks * acc_rows, _LANES),
                                           jnp.float32),
            grid_spec=pltpu.PrefetchScalarGridSpec(
                num_scalar_prefetch=0,
                grid=(nchunks, blocks_per_chunk),
                in_specs=[pl.BlockSpec((p1_rows, _LANES), _in_map)],
                out_specs=pl.BlockSpec((acc_rows, _LANES),
                                       lambda chunk, step: (chunk, 0)),
            ),
            compiler_params=pltpu.CompilerParams(
                dimension_semantics=("parallel", "arbitrary"),
                vmem_limit_bytes=_VMEM_LIMIT),
        )(x2d)

        pm_rows = nchunks * acc_rows
        extra_in = (partial_max,)
        # Tiny resident input (constant index map) -> loaded into VMEM once;
        # the floor is finalized inside pass 2, no extra XLA dispatch.
        extra_specs = [pl.BlockSpec((pm_rows, _LANES), lambda i: (0, 0))]
        k2 = functools.partial(_db_floor_kernel, amin=amin, ref_db=ref_db,
                               top_db=float(top_db))
    else:
        k2 = functools.partial(_db_kernel, amin=amin, ref_db=ref_db)

    # ---------------- pass 2: dB conversion (+ clamp) ----------------
    p2_rows = min(_P2_MAX_BLOCK_ROWS, total_rows)
    p2_blocks = pl.cdiv(total_rows, p2_rows)
    # Partial tail block (total_rows % p2_rows != 0): the kernel computes on a
    # few stale rows past the slab, but Pallas only writes back the in-bounds
    # region and TPUs do not trap on NaN/Inf, so the result is unaffected.
    out2d = pl.pallas_call(
        k2,
        out_shape=jax.ShapeDtypeStruct((total_rows, _LANES), jnp.float32),
        grid_spec=pltpu.PrefetchScalarGridSpec(
            num_scalar_prefetch=0,
            grid=(p2_blocks,),
            in_specs=extra_specs + [
                pl.BlockSpec((p2_rows, _LANES), lambda i: (i, 0))],
            out_specs=pl.BlockSpec((p2_rows, _LANES), lambda i: (i, 0)),
        ),
        compiler_params=pltpu.CompilerParams(
            dimension_semantics=("parallel",),
            vmem_limit_bytes=_VMEM_LIMIT),
    )(*extra_in, x2d)

    out_flat = out2d.reshape(-1)
    if pad:
        out_flat = out_flat[:n]
    return out_flat.reshape(orig_shape)


def _reference(S, ref=1.0, amin=1e-10, top_db=80.0):
    S = jnp.asarray(S, jnp.float32)
    log_spec = 10.0 * jnp.log10(jnp.maximum(S, amin))
    log_spec = log_spec - 10.0 * jnp.log10(
        jnp.maximum(jnp.abs(jnp.asarray(ref, jnp.float32)), amin))
    if top_db is not None:
        log_spec = jnp.maximum(log_spec, jnp.max(log_spec) - top_db)
    return log_spec


if __name__ == "__main__":
    key = jax.random.PRNGKey(0)
    # Power-spectrogram-like NCHW input (B, C, H, W), non-negative.
    x = jax.random.uniform(key, (2, 4, 16, 16), dtype=jnp.float32,
                           minval=0.0, maxval=5.0)
    # Sprinkle tiny values to exercise the amin clamp and the top_db floor.
    x = x.at[0, 0, 0, :4].set(jnp.array([0.0, 1e-12, 1e-11, 1e-9]))

    out = jax.block_until_ready(power_to_db(x))
    ref_out = jax.block_until_ready(_reference(x))
    np.testing.assert_allclose(np.asarray(out), np.asarray(ref_out),
                               rtol=1e-5, atol=1e-4)

    # top_db=None branch + a ragged shape that needs host-side padding.
    y = jax.random.uniform(jax.random.PRNGKey(1), (3, 5, 7),
                           dtype=jnp.float32, minval=0.0, maxval=2.0)
    out2 = jax.block_until_ready(power_to_db(y, top_db=None))
    ref2 = jax.block_until_ready(_reference(y, top_db=None))
    np.testing.assert_allclose(np.asarray(out2), np.asarray(ref2),
                               rtol=1e-5, atol=1e-4)

    # Native bf16 streaming path (upcast happens in-register inside kernels).
    xb = x.astype(jnp.bfloat16)
    out3 = jax.block_until_ready(power_to_db(xb))
    ref3 = jax.block_until_ready(_reference(xb))
    np.testing.assert_allclose(np.asarray(out3), np.asarray(ref3),
                               rtol=1e-5, atol=1e-3)

    print("KERNEL_OK")
</pallas_src>

<mosaic_0001>
module attributes {stable_mosaic.version = 11 : i64} {
  func.func @_max_kernel(%arg0: i32, %arg1: i32, %arg2: memref<16x128xf32, #tpu.memory_space<vmem>>, %arg3: memref<16x128xf32, #tpu.memory_space<vmem>>) attributes {dimension_semantics = [#tpu.dimension_semantics<parallel>, #tpu.dimension_semantics<arbitrary>], iteration_bounds = array<i64: 1, 1>, scalar_prefetch = 0 : i64, scratch_operands = 0 : i64, tpu.core_type = #tpu.core_type<tc>, window_params = [{transform_indices = @transform_0, window_bounds = array<i64: 16, 128>}, {transform_indices = @transform_1, window_bounds = array<i64: 16, 128>}]} {
    %c1_i32 = arith.constant 1 : i32
    %0 = arith.muli %arg0, %c1_i32 : i32
    %1 = arith.addi %0, %arg1 : i32
    %c0_i32 = arith.constant 0 : i32
    %2 = arith.cmpi eq, %arg1, %c0_i32 : i32
    %3 = arith.extui %2 : i1 to i32
    %c0_i32_0 = arith.constant 0 : i32
    %4 = arith.cmpi ne, %3, %c0_i32_0 : i32
    scf.if %4 {
      %cst = arith.constant 0xFF800000 : f32
      %8 = vector.broadcast %cst : f32 to vector<16x128xf32>
      %c0 = arith.constant 0 : index
      %c0_3 = arith.constant 0 : index
      %9 = vector.load %arg3[%c0, %c0_3] : memref<16x128xf32, #tpu.memory_space<vmem>>, vector<16x128xf32>
      tpu.vector_store %arg3[%c0, %c0_3], %8 {strides = array<i32>} : memref<16x128xf32, #tpu.memory_space<vmem>>, vector<16x128xf32>,
    } else {
    }
    %c1_i32_1 = arith.constant 1 : i32
    %5 = arith.cmpi slt, %1, %c1_i32_1 : i32
    %6 = arith.extui %5 : i1 to i32
    %c0_i32_2 = arith.constant 0 : i32
    %7 = arith.cmpi ne, %6, %c0_i32_2 : i32
    scf.if %7 {
      %c0 = arith.constant 0 : index
      %c0_3 = arith.constant 0 : index
      %8 = vector.load %arg2[%c0, %c0_3] : memref<16x128xf32, #tpu.memory_space<vmem>>, vector<16x128xf32>
      %9 = vector.shape_cast %8 : vector<16x128xf32> to vector<1x16x128xf32>
      %cst = arith.constant dense<0xFF800000> : vector<16x128xf32>
      %10 = vector.multi_reduction <maximumf>, %9, %cst [0] : vector<1x16x128xf32> to vector<16x128xf32>
      %c0_4 = arith.constant 0 : index
      %c0_5 = arith.constant 0 : index
      %11 = vector.load %arg3[%c0_4, %c0_5] : memref<16x128xf32, #tpu.memory_space<vmem>>, vector<16x128xf32>
      %12 = arith.maximumf %11, %10 : vector<16x128xf32>
      %c0_6 = arith.constant 0 : index
      %c0_7 = arith.constant 0 : index
      %13 = vector.load %arg3[%c0_6, %c0_7] : memref<16x128xf32, #tpu.memory_space<vmem>>, vector<16x128xf32>
      tpu.vector_store %arg3[%c0_6, %c0_7], %12 {strides = array<i32>} : memref<16x128xf32, #tpu.memory_space<vmem>>, vector<16x128xf32>,
    } else {
    }
    return
  }
  func.func @transform_0(%arg0: i32, %arg1: i32) -> (i32, i32) {
    %c1_i32 = arith.constant 1 : i32
    %0 = arith.muli %arg0, %c1_i32 : i32
    %1 = arith.addi %0, %arg1 : i32
    %c0_i32 = arith.constant 0 : i32
    %2 = arith.minsi %1, %c0_i32 : i32
    %c0_i32_0 = arith.constant 0 : i32
    %c0_i32_1 = arith.constant 0 : i32
    return %2, %c0_i32_0 : i32, i32
  }
  func.func @transform_1(%arg0: i32, %arg1: i32) -> (i32, i32) {
    %c0_i32 = arith.constant 0 : i32
    %c0_i32_0 = arith.constant 0 : i32
    return %arg0, %c0_i32 : i32, i32
  }
}

</mosaic_0001>

<llo_original>
// kernel: tpu_custom_call.1
$region0: #{tpu_custom_call.1}
  #allocation0 [shape = 'u32[]', space=smem, size = 0x4, offset = 0x4, fixed_abs, tag = 'smem constant byte address 0x4 - core index']
  #allocation1 [shape = 'u32[144,128]{1,0:T(1,128)}', space=vmem, size = 0x12000, scoped, tag = 'internal scratch']
  %s0 = inlined_call_operand.hbm [shape: f32[16,128], index: 0, kind: input, shape index: {}]
  %s1 = inlined_call_operand.hbm [shape: f32[16,128], index: 1, kind: output, shape index: {}]
  %s2 = sld [smem:[#allocation0]]
  $region26: #{tpu_custom_call.1} parent=0
    _
  %s4 = ssub.s32 1, %s2
  %s5 = scalar_select 0, %s4, %s2
  $region1: #{tpu_custom_call.1} parent=0
    #allocation2 [shape = 'u8[8192]{0}', space=vmem, size = 0x2000, scoped, tag = 'input window, operand 0, single buffered']
    #allocation3 [shape = 's32[1]{0}', space=sflag, size = 0x4, scoped, tag = 'scoped memory for tpu_custom_call.1']
    #allocation4 [shape = 's32[1]{0}', space=sflag, size = 0x4, scoped, tag = 'scoped memory for tpu_custom_call.1']
    #allocation5 [shape = 'u8[8192]{0}', space=vmem, size = 0x2000, scoped, tag = 'output window, operand 0, single buffered']
    %6 = vsyncpa [#allocation3], 0
    %7 = vsyncpa [#allocation4], 0
    // Predicated region
    $region2: #{tpu_custom_call.1} parent=1 // pred_check
      _
    $region3: #{tpu_custom_call.1} parent=1 // pred_check_branch
      %9 = sbr.rel (0) target = $region5
    $region4: #{tpu_custom_call.1} parent=1 // pred_region
      %s10 = sadd.s32 0, 0
      %p11 = scmp.lt.s32.totalorder %s10, 0
      %s12 = scalar_select %p11, %s10, 0
      %s13 = smul.u32 2, %s12
      %s15 = ssub.s32 256, 256
      %16 = vsyncadd [#allocation3], %s15
      %s17 = smul.addr %s13, 128
      %s18 = scalar_lea.hbm %s0, %s17
      %s19 = sshll.u32 [#allocation2], 4
      %s20 = int_to_ptr.vmem [resolvable:$true] %s19
      %25 = dma.hbm_to_vmem [thread:$0]  %s18, 256, %s20, [#allocation3], 128, 128, 8
    $region5: #{tpu_custom_call.1} parent=1 // pred_fallthru
      _
    // Predicated region
    $region6: #{tpu_custom_call.1} parent=1 // pred_check
      _
    $region7: #{tpu_custom_call.1} parent=1 // pred_check_branch
      %27 = sbr.rel (0) target = $region9
    $region8: #{tpu_custom_call.1} parent=1 // pred_region
      %28 = dma.done [#allocation3], 256
    $region9: #{tpu_custom_call.1} parent=1 // pred_fallthru
      _
    %s29 = sadd.s32 0, 0
    %p30 = scmp.lt.s32.totalorder %s29, 0
    %s31 = scalar_select %p30, %s29, 0
    %s32 = smul.u32 2, %s31
    %s33 = sadd.s32 0, 0
    %p34 = scmp.eq.s32.totalorder 0, 0
    // Predicated region
    $region10: #{tpu_custom_call.1} parent=1 // pred_check
      %p35 = pneg %p34
    $region11: #{tpu_custom_call.1} parent=1 // pred_check_branch
      %37 = sbr.rel (%p35) target = $region13
    $region12: #{tpu_custom_call.1} parent=1 // pred_region
      %38 = vst [vmem:[#allocation5] sm:$0xff] -inf
      %39 = vst [vmem:[#allocation5 + $0x8] sm:$0xff] -inf
    $region13: #{tpu_custom_call.1} parent=1 // pred_fallthru
      _
    %p40 = scmp.lt.s32.totalorder %s33, 1
    // Predicated region
    $region14: #{tpu_custom_call.1} parent=1 // pred_check
      %p41 = pneg %p40
    $region15: #{tpu_custom_call.1} parent=1 // pred_check_branch
      %43 = sbr.rel (%p41) target = $region17
    $region16: #{tpu_custom_call.1} parent=1 // pred_region
      %v44 = vld [vmem:[#allocation2] sm:$0xff]
      %v45 = vld [vmem:[#allocation2 + $0x8] sm:$0xff]
      %v46 = vld [vmem:[#allocation5] sm:$0xff]
      %v47 = vld [vmem:[#allocation5 + $0x8] sm:$0xff]
      %v48 = vmax.f32 %v46, %v44
      %v49 = vmax.f32 %v47, %v45
      %50 = vst [vmem:[#allocation5] sm:$0xff] %v48
      %51 = vst [vmem:[#allocation5 + $0x8] sm:$0xff] %v49
    $region17: #{tpu_custom_call.1} parent=1 // pred_fallthru
      _
    // Predicated region
    $region18: #{tpu_custom_call.1} parent=1 // pred_check
      _
    $region19: #{tpu_custom_call.1} parent=1 // pred_check_branch
      %53 = sbr.rel (0) target = $region21
    $region20: #{tpu_custom_call.1} parent=1 // pred_region
      %s55 = ssub.s32 256, 256
      %56 = vsyncadd [#allocation4], %s55
      %s57 = sshll.u32 [#allocation5], 4
      %s58 = int_to_ptr.vmem [resolvable:$true] %s57
      %63 = dma.vmem_to_hbm [thread:$0]  %s58, 256, %s1, [#allocation4], 128, 128, 8
    $region21: #{tpu_custom_call.1} parent=1 // pred_fallthru
      _
    // Predicated region
    $region22: #{tpu_custom_call.1} parent=1 // pred_check
      _
    $region23: #{tpu_custom_call.1} parent=1 // pred_check_branch
      %65 = sbr.rel (0) target = $region25
    $region24: #{tpu_custom_call.1} parent=1 // pred_region
      %66 = dma.done [#allocation4], 256
    $region25: #{tpu_custom_call.1} parent=1 // pred_fallthru
      _
    %67 = vsyncpa [#allocation3], 1
    %68 = vsyncpa [#allocation4], 1

</llo_original>
